<compile_context>
chip_gen: v5e
topology: v5e:2x2
jax: 0.10.0
libtpu: 0.0.40
codegen_flags: <defaults>
</compile_context>

<pallas_src>
import functools

import jax
import jax.numpy as jnp
from jax import lax
from jax.experimental import pallas as pl
from jax.experimental.pallas import tpu as pltpu

KSIZE = 3          # conv kernel size -> 3 samples of causal history
_LANE = 128        # TPU vreg lane width


@functools.lru_cache(maxsize=1)
def _device_budgets():
    """(input-block bytes per grid step, vmem_limit_bytes) per TPU generation."""
    try:
        kind = jax.devices()[0].device_kind.lower()
    except Exception:
        kind = ""
    if "v5" in kind or "v6" in kind:
        # 128 MiB physical VMEM: large blocks amortize per-step overhead.
        return 6 * 1024 * 1024, 64 * 1024 * 1024
    if "v7" in kind or "7x" in kind:
        # 64 MiB physical VMEM per TensorCore.
        return 4 * 1024 * 1024, 48 * 1024 * 1024
    # Unknown / older parts: stay conservative.
    return 2 * 1024 * 1024, 24 * 1024 * 1024


def _conv_channels(w_ref, b_ref, x_m3, x_m2, x_m1):
    """means, stds from the three causally shifted inputs.

    Channel 1 (log variance) weights/bias were pre-scaled by 0.5 in the wrapper,
    so stds = exp(channel-1 output) directly.
    """
    means = (b_ref[0]
             + w_ref[0, 0] * x_m3
             + w_ref[0, 1] * x_m2
             + w_ref[0, 2] * x_m1)
    half_log_var = (b_ref[1]
                    + w_ref[1, 0] * x_m3
                    + w_ref[1, 1] * x_m2
                    + w_ref[1, 2] * x_m1)
    return means, jnp.exp(half_log_var)


def _single_chunk_kernel(x_ref, w_ref, b_ref, means_ref, stds_ref):
    """One batch tile; the whole (padded) sequence lives in this block.

    x_ref: (TN, TL) VMEM   w_ref: (2, 3) SMEM   b_ref: (2,) SMEM
    means_ref / stds_ref: (TN, TL) VMEM outputs
    """
    tn, tl = means_ref.shape
    x = x_ref[...]
    col = lax.broadcasted_iota(jnp.int32, (tn, tl), 1)
    # roll(x, k)[t] = x[t - k]; the first k lanes (wrap-around) are the zero
    # causal history, masked with a single iota compare + select per shift.
    x_m3 = jnp.where(col < 3, 0.0, pltpu.roll(x, 3, axis=1))
    x_m2 = jnp.where(col < 2, 0.0, pltpu.roll(x, 2, axis=1))
    x_m1 = jnp.where(col < 1, 0.0, pltpu.roll(x, 1, axis=1))
    means, stds = _conv_channels(w_ref, b_ref, x_m3, x_m2, x_m1)
    means_ref[...] = means.astype(means_ref.dtype)
    stds_ref[...] = stds.astype(stds_ref.dtype)


def _chunked_kernel(x_ref, halo_ref, w_ref, b_ref, means_ref, stds_ref):
    """L-tiled path: chunk j takes its 3-sample history from chunk j-1.

    x_ref:    (TN, TL)  current chunk
    halo_ref: (TN, 128) last 128 samples of the previous chunk (garbage for j==0)
    """
    tn, tl = means_ref.shape
    x = x_ref[...]

    # Lanes >= 128 only need in-chunk history (shift <= 3): plain rolls.
    if tl > _LANE:
        means_b, stds_b = _conv_channels(
            w_ref, b_ref,
            pltpu.roll(x, 3, axis=1),
            pltpu.roll(x, 2, axis=1),
            pltpu.roll(x, 1, axis=1))
        means_ref[:, _LANE:] = means_b[:, _LANE:].astype(means_ref.dtype)
        stds_ref[:, _LANE:] = stds_b[:, _LANE:].astype(stds_ref.dtype)

    # First 128 lanes: splice in the previous chunk's tail via a second roll and
    # a lane-index select.  Chunk 0 has a zero history.
    j = pl.program_id(1)
    halo = halo_ref[...] * (j > 0).astype(jnp.float32)
    x_head = x[:, :_LANE]
    col = lax.broadcasted_iota(jnp.int32, (tn, _LANE), 1)

    def shifted_head(k):
        return jnp.where(col < k,
                         pltpu.roll(halo, k, axis=1),
                         pltpu.roll(x_head, k, axis=1))

    means_h, stds_h = _conv_channels(
        w_ref, b_ref, shifted_head(3), shifted_head(2), shifted_head(1))
    means_ref[:, :_LANE] = means_h.astype(means_ref.dtype)
    stds_ref[:, :_LANE] = stds_h.astype(stds_ref.dtype)


def _choose_tiles(n, lp, block_bytes):
    """Pick (rows, lanes) per grid step for a padded (n, lp) float32 problem."""
    # Lane tile: keep the whole (128-padded) sequence per step if an 8-row slab
    # of it fits the per-step input budget; otherwise tile L in multiples of 128.
    if lp <= _LANE or 8 * lp * 4 <= block_bytes:
        tl = lp
    else:
        tl = max(_LANE, (block_bytes // (8 * 4) // _LANE) * _LANE)
        tl = min(tl, lp)
    # Row tile: multiple of 8 (or the whole batch when it is tiny).
    if n <= 8:
        tn = n
    else:
        rows = max(8, min(block_bytes // (tl * 4), n))
        tn = (rows // 8) * 8
    # v7x has two TensorCores: make sure the "parallel" grid exposes >= 2 steps
    # whenever the batch allows it.
    if n > 8 and pl.cdiv(n, tn) * pl.cdiv(lp, tl) == 1:
        tn = ((pl.cdiv(n, 2) + 7) // 8) * 8
    return tn, tl


@functools.partial(jax.jit, static_argnames=("block_rows", "block_lanes", "out_dtype"))
def network_forward(x, cur_gt, weight, bias, *,
                    block_rows=None, block_lanes=None, out_dtype=jnp.float32):
    """Pallas equivalent of Network.forward.

    x:      (N, 1, L)   (NCL, like the PyTorch Conv1d input)
    cur_gt: unused (kept to mirror the PyTorch signature)
    weight: (2, 1, 3)   conv1.weight
    bias:   (2,)        conv1.bias
    returns (means, stds), each (N, L) in `out_dtype` (float32 default; bfloat16
    cuts output HBM traffic by ~1/3 on this memory-bound op if acceptable).
    """
    del cur_gt  # unused by the reference forward pass
    n, c, l = x.shape
    assert c == 1

    x2 = x[:, 0, :].astype(jnp.float32)                               # (N, L)
    # Fold the 0.5 of exp(0.5 * log_var) into the log-var channel's params.
    chan_scale = jnp.array([1.0, 0.5], dtype=jnp.float32)
    w2 = weight[:, 0, :].astype(jnp.float32) * chan_scale[:, None]    # (2, 3)
    b2 = bias.astype(jnp.float32) * chan_scale                        # (2,)

    # Keep the lane (last) dim a multiple of 128: lane-dense stores, native rolls.
    lp = ((l + _LANE - 1) // _LANE) * _LANE
    if lp != l:
        x2 = jnp.pad(x2, ((0, 0), (0, lp - l)))

    block_bytes, vmem_limit = _device_budgets()
    tn, tl = _choose_tiles(n, lp, block_bytes)
    if block_rows is not None:
        tn = block_rows
    if block_lanes is not None:
        tl = block_lanes
    assert tn == n or tn % 8 == 0
    assert tl == lp or tl % _LANE == 0
    use_halo = tl < lp
    grid = (pl.cdiv(n, tn), pl.cdiv(lp, tl))

    in_specs = [pl.BlockSpec((tn, tl), lambda i, j: (i, j))]          # x chunk
    operands = [x2]
    if use_halo:
        tlb = tl // _LANE
        # Last 128 samples of the previous chunk (same array, different window).
        in_specs.append(pl.BlockSpec(
            (tn, _LANE), lambda i, j: (i, jnp.maximum(j * tlb - 1, 0))))
        operands.append(x2)
    in_specs += [
        pl.BlockSpec(memory_space=pltpu.MemorySpace.SMEM),            # weights (2, 3)
        pl.BlockSpec(memory_space=pltpu.MemorySpace.SMEM),            # bias (2,)
    ]
    operands += [w2, b2]

    out_spec = pl.BlockSpec((tn, tl), lambda i, j: (i, j))
    out_shape = (jax.ShapeDtypeStruct((n, lp), out_dtype),
                 jax.ShapeDtypeStruct((n, lp), out_dtype))

    kernel = _chunked_kernel if use_halo else _single_chunk_kernel
    means, stds = pl.pallas_call(
        kernel,
        out_shape=out_shape,
        grid=grid,
        in_specs=in_specs,
        out_specs=(out_spec, out_spec),
        compiler_params=pltpu.CompilerParams(
            dimension_semantics=("parallel", "parallel"),
            vmem_limit_bytes=vmem_limit,
        ),
    )(*operands)

    if lp != l:
        means = means[:, :l]
        stds = stds[:, :l]
    return means, stds


def init_params():
    """Deterministic synthetic parameters matching nn.Conv1d(1, 2, 3) shapes."""
    weight = (jnp.arange(2 * 1 * 3, dtype=jnp.float32).reshape(2, 1, 3) - 2.5) * 0.1
    bias = jnp.array([0.05, -0.02], dtype=jnp.float32)
    return weight, bias


def _reference_forward(x, weight, bias):
    """Independent reference using lax.conv_general_dilated (matches PyTorch)."""
    y = lax.conv_general_dilated(
        x.astype(jnp.float32), weight, window_strides=(1,),
        padding=[(KSIZE, KSIZE)], dimension_numbers=("NCH", "OIH", "NCH"))
    y = y + bias[None, :, None]
    y = y[:, :, :-(KSIZE + 1)]          # x[:, :, :-padding-1]
    return y[:, 0, :], jnp.exp(0.5 * y[:, 1, :])


def _check(name, got, want):
    m, s = got
    rm, rs = want
    assert m.shape == rm.shape and s.shape == rs.shape, name
    assert jnp.allclose(m, rm, atol=1e-5, rtol=1e-5), name
    assert jnp.allclose(s, rs, atol=1e-5, rtol=1e-5), name


if __name__ == "__main__":
    key = jax.random.PRNGKey(0)
    weight, bias = init_params()

    # Case 1: tiny NCL input (L=16 -> padded to 128 lanes inside the wrapper).
    x1 = jax.random.normal(key, (2, 1, 16), dtype=jnp.float32)
    out1 = network_forward(x1, jnp.zeros_like(x1), weight, bias)
    jax.block_until_ready(out1)
    _check("case1", out1, _reference_forward(x1, weight, bias))

    # Case 2: batch-tiled pipeline; auto tiling splits the batch into >=2 steps.
    x2 = jax.random.normal(jax.random.fold_in(key, 1), (24, 1, 128), dtype=jnp.float32)
    out2 = network_forward(x2, jnp.zeros_like(x2), weight, bias)
    jax.block_until_ready(out2)
    _check("case2", out2, _reference_forward(x2, weight, bias))

    # Case 3: L tiled into 256-lane chunks with a cross-chunk causal halo
    # (last chunk is partial), exercising the long-sequence path.
    x3 = jax.random.normal(jax.random.fold_in(key, 2), (8, 1, 640), dtype=jnp.float32)
    out3 = network_forward(x3, jnp.zeros_like(x3), weight, bias, block_lanes=256)
    jax.block_until_ready(out3)
    _check("case3", out3, _reference_forward(x3, weight, bias))

    # Case 4: 128-lane chunks (head-only store path of the chunked kernel).
    x4 = jax.random.normal(jax.random.fold_in(key, 3), (4, 1, 256), dtype=jnp.float32)
    out4 = network_forward(x4, jnp.zeros_like(x4), weight, bias, block_lanes=128)
    jax.block_until_ready(out4)
    _check("case4", out4, _reference_forward(x4, weight, bias))

    print("KERNEL_OK")
</pallas_src>

<mosaic_0001>
module attributes {stable_mosaic.version = 11 : i64} {
  func.func @_single_chunk_kernel(%arg0: i32, %arg1: i32, %arg2: memref<2x128xf32, #tpu.memory_space<vmem>>, %arg3: memref<2x3xf32, #tpu.memory_space<smem>>, %arg4: memref<2xf32, #tpu.memory_space<smem>>, %arg5: memref<2x128xf32, #tpu.memory_space<vmem>>, %arg6: memref<2x128xf32, #tpu.memory_space<vmem>>) attributes {dimension_semantics = [#tpu.dimension_semantics<parallel>, #tpu.dimension_semantics<parallel>], iteration_bounds = array<i64: 1, 1>, scalar_prefetch = 0 : i64, scratch_operands = 0 : i64, tpu.core_type = #tpu.core_type<tc>, window_params = [{transform_indices = @transform_0, window_bounds = array<i64: 2, 128>}, {transform_indices = @transform_1, window_bounds = array<i64: 2, 3>}, {transform_indices = @transform_2, window_bounds = array<i64: 2>}, {transform_indices = @transform_3, window_bounds = array<i64: 2, 128>}, {transform_indices = @transform_4, window_bounds = array<i64: 2, 128>}]} {
    %c0 = arith.constant 0 : index
    %c0_0 = arith.constant 0 : index
    %0 = vector.load %arg2[%c0, %c0_0] : memref<2x128xf32, #tpu.memory_space<vmem>>, vector<2x128xf32>
    %1 = tpu.iota {dimensions = array<i32: 1>} : vector<2x128xi32>
    %c3_i32 = arith.constant 3 : i32
    %2 = vector.broadcast %c3_i32 : i32 to vector<2x128xi32>
    %3 = arith.cmpi slt, %1, %2 : vector<2x128xi32>
    %c3_i32_1 = arith.constant 3 : i32
    %4 = tpu.dynamic_rotate %0 by %c3_i32_1 dim 1 : vector<2x128xf32>, i32 -> vector<2x128xf32>
    %cst = arith.constant 0.000000e+00 : f32
    %5 = vector.broadcast %cst : f32 to vector<2x128xf32>
    %6 = arith.select %3, %5, %4 : vector<2x128xi1>, vector<2x128xf32>
    %c2_i32 = arith.constant 2 : i32
    %7 = vector.broadcast %c2_i32 : i32 to vector<2x128xi32>
    %8 = arith.cmpi slt, %1, %7 : vector<2x128xi32>
    %c2_i32_2 = arith.constant 2 : i32
    %9 = tpu.dynamic_rotate %0 by %c2_i32_2 dim 1 : vector<2x128xf32>, i32 -> vector<2x128xf32>
    %cst_3 = arith.constant 0.000000e+00 : f32
    %10 = vector.broadcast %cst_3 : f32 to vector<2x128xf32>
    %11 = arith.select %8, %10, %9 : vector<2x128xi1>, vector<2x128xf32>
    %c1_i32 = arith.constant 1 : i32
    %12 = vector.broadcast %c1_i32 : i32 to vector<2x128xi32>
    %13 = arith.cmpi slt, %1, %12 : vector<2x128xi32>
    %c1_i32_4 = arith.constant 1 : i32
    %14 = tpu.dynamic_rotate %0 by %c1_i32_4 dim 1 : vector<2x128xf32>, i32 -> vector<2x128xf32>
    %cst_5 = arith.constant 0.000000e+00 : f32
    %15 = vector.broadcast %cst_5 : f32 to vector<2x128xf32>
    %16 = arith.select %13, %15, %14 : vector<2x128xi1>, vector<2x128xf32>
    %c0_6 = arith.constant 0 : index
    %17 = memref.load %arg4[%c0_6] : memref<2xf32, #tpu.memory_space<smem>>
    %c0_7 = arith.constant 0 : index
    %c0_8 = arith.constant 0 : index
    %18 = memref.load %arg3[%c0_7, %c0_8] : memref<2x3xf32, #tpu.memory_space<smem>>
    %19 = vector.broadcast %18 : f32 to vector<2x128xf32>
    %20 = arith.mulf %19, %6 : vector<2x128xf32>
    %21 = vector.broadcast %17 : f32 to vector<2x128xf32>
    %22 = arith.addf %21, %20 : vector<2x128xf32>
    %c0_9 = arith.constant 0 : index
    %c1 = arith.constant 1 : index
    %23 = memref.load %arg3[%c0_9, %c1] : memref<2x3xf32, #tpu.memory_space<smem>>
    %24 = vector.broadcast %23 : f32 to vector<2x128xf32>
    %25 = arith.mulf %24, %11 : vector<2x128xf32>
    %26 = arith.addf %22, %25 : vector<2x128xf32>
    %c0_10 = arith.constant 0 : index
    %c2 = arith.constant 2 : index
    %27 = memref.load %arg3[%c0_10, %c2] : memref<2x3xf32, #tpu.memory_space<smem>>
    %28 = vector.broadcast %27 : f32 to vector<2x128xf32>
    %29 = arith.mulf %28, %16 : vector<2x128xf32>
    %30 = arith.addf %26, %29 : vector<2x128xf32>
    %c1_11 = arith.constant 1 : index
    %31 = memref.load %arg4[%c1_11] : memref<2xf32, #tpu.memory_space<smem>>
    %c1_12 = arith.constant 1 : index
    %c0_13 = arith.constant 0 : index
    %32 = memref.load %arg3[%c1_12, %c0_13] : memref<2x3xf32, #tpu.memory_space<smem>>
    %33 = vector.broadcast %32 : f32 to vector<2x128xf32>
    %34 = arith.mulf %33, %6 : vector<2x128xf32>
    %35 = vector.broadcast %31 : f32 to vector<2x128xf32>
    %36 = arith.addf %35, %34 : vector<2x128xf32>
    %c1_14 = arith.constant 1 : index
    %c1_15 = arith.constant 1 : index
    %37 = memref.load %arg3[%c1_14, %c1_15] : memref<2x3xf32, #tpu.memory_space<smem>>
    %38 = vector.broadcast %37 : f32 to vector<2x128xf32>
    %39 = arith.mulf %38, %11 : vector<2x128xf32>
    %40 = arith.addf %36, %39 : vector<2x128xf32>
    %c1_16 = arith.constant 1 : index
    %c2_17 = arith.constant 2 : index
    %41 = memref.load %arg3[%c1_16, %c2_17] : memref<2x3xf32, #tpu.memory_space<smem>>
    %42 = vector.broadcast %41 : f32 to vector<2x128xf32>
    %43 = arith.mulf %42, %16 : vector<2x128xf32>
    %44 = arith.addf %40, %43 : vector<2x128xf32>
    %45 = math.exp %44 : vector<2x128xf32>
    %c0_18 = arith.constant 0 : index
    %c0_19 = arith.constant 0 : index
    %46 = vector.load %arg5[%c0_18, %c0_19] : memref<2x128xf32, #tpu.memory_space<vmem>>, vector<2x128xf32>
    tpu.vector_store %arg5[%c0_18, %c0_19], %30 {strides = array<i32>} : memref<2x128xf32, #tpu.memory_space<vmem>>, vector<2x128xf32>,
    %c0_20 = arith.constant 0 : index
    %c0_21 = arith.constant 0 : index
    %47 = vector.load %arg6[%c0_20, %c0_21] : memref<2x128xf32, #tpu.memory_space<vmem>>, vector<2x128xf32>
    tpu.vector_store %arg6[%c0_20, %c0_21], %45 {strides = array<i32>} : memref<2x128xf32, #tpu.memory_space<vmem>>, vector<2x128xf32>,
    return
  }
  func.func @transform_0(%arg0: i32, %arg1: i32) -> (i32, i32) {
    %c0_i32 = arith.constant 0 : i32
    return %arg0, %arg1 : i32, i32
  }
  func.func @transform_1(%arg0: i32, %arg1: i32) -> (i32, i32) {
    %c0_i32 = arith.constant 0 : i32
    %c0_i32_0 = arith.constant 0 : i32
    %c0_i32_1 = arith.constant 0 : i32
    return %c0_i32, %c0_i32_0 : i32, i32
  }
  func.func @transform_2(%arg0: i32, %arg1: i32) -> i32 {
    %c0_i32 = arith.constant 0 : i32
    %c0_i32_0 = arith.constant 0 : i32
    return %c0_i32 : i32
  }
  func.func @transform_3(%arg0: i32, %arg1: i32) -> (i32, i32) {
    %c0_i32 = arith.constant 0 : i32
    return %arg0, %arg1 : i32, i32
  }
  func.func @transform_4(%arg0: i32, %arg1: i32) -> (i32, i32) {
    %c0_i32 = arith.constant 0 : i32
    return %arg0, %arg1 : i32, i32
  }
}

</mosaic_0001>

<llo_original>
// kernel: mul.9
$region0: #{mul.9}
  #allocation0 [shape = 's32[1]{0}', space=sflag, size = 0x4, scoped, tag = 'scoped memory for mul.9']
  %s0 = inlined_call_operand.vmem [shape: f32[2], index: 0, kind: input, shape index: {}]
  %s1 = inlined_call_operand.vmem [shape: f32[2], index: 1, kind: input, shape index: {}]
  %s2 = inlined_call_operand.vmem [shape: f32[2], index: 2, kind: output, shape index: {}]
  %v3 = vld [vmem:[%s0] sm:$0x1]
  %v4 = vld [vmem:[%s1] sm:$0x1]
  %5 = xla_tuple %v3, %v4
  %6 = xla_tuple %5
  %v7 = vmul.f32 %v3, %v4
  %8 = xla_tuple %v7
  %9 = vst [vmem:[%s2] sm:$0x1] %v7

// kernel: network_forward.1
$region0: #{network_forward.1}
  #allocation0 [shape = 'u32[]', space=smem, size = 0x4, offset = 0x4, fixed_abs, tag = 'smem constant byte address 0x4 - core index']
  #allocation1 [shape = 'u32[72,128]{1,0:T(1,128)}', space=vmem, size = 0x9000, scoped, tag = 'internal scratch']
  %s0 = inlined_call_operand.vmem [shape: f32[2,128], index: 0, kind: input, shape index: {}]
  %s1 = inlined_call_operand.vmem [shape: f32[2,3], index: 1, kind: input, shape index: {}]
  %s2 = inlined_call_operand.vmem [shape: f32[2], index: 2, kind: input, shape index: {}]
  %s3 = inlined_call_operand.hbm [shape: f32[2,128], index: 3, kind: output, shape index: {0}]
  %s4 = inlined_call_operand.hbm [shape: f32[2,128], index: 4, kind: output, shape index: {1}]
  %5 = xla_tuple %s3, %s4
  %s6 = sld [smem:[#allocation0]]
  $region38: #{network_forward.1} parent=0
    _
  %s8 = ssub.s32 1, %s6
  %s9 = scalar_select 0, %s8, %s6
  $region1: #{network_forward.1} parent=0
    #allocation2 [shape = 'u8[1024]{0}', space=smem, size = 0x400, scoped, tag = 'input window, operand 1, single buffered']
    #allocation3 [shape = 's32[1]{0}', space=sflag, size = 0x4, scoped, tag = 'scoped memory for network_forward.1']
    #allocation4 [shape = 's32[1]{0}', space=sflag, size = 0x4, scoped, tag = 'scoped memory for network_forward.1']
    #allocation5 [shape = 'u8[512]{0}', space=smem, size = 0x200, scoped, tag = 'input window, operand 2, single buffered']
    #allocation6 [shape = 's32[1]{0}', space=sflag, size = 0x4, scoped, tag = 'scoped memory for network_forward.1']
    #allocation7 [shape = 'u8[1024]{0}', space=vmem, size = 0x400, scoped, tag = 'output window, operand 0, single buffered']
    #allocation8 [shape = 'u8[1024]{0}', space=vmem, size = 0x400, scoped, tag = 'output window, operand 1, single buffered']
    #allocation9 [shape = 's32[1]{0}', space=sflag, size = 0x4, scoped, tag = 'scoped memory for network_forward.1']
    %10 = vsyncpa [#allocation4], 0
    %11 = vsyncpa [#allocation6], 0
    %12 = vsyncpa [#allocation3], 0
    %13 = vsyncpa [#allocation9], 0
    // Predicated region
    $region2: #{network_forward.1} parent=1 // pred_check
      _
    $region3: #{network_forward.1} parent=1 // pred_check_branch
      %15 = sbr.rel (0) target = $region5
    $region4: #{network_forward.1} parent=1 // pred_region
      _
    $region5: #{network_forward.1} parent=1 // pred_fallthru
      _
    // Predicated region
    $region6: #{network_forward.1} parent=1 // pred_check
      _
    $region7: #{network_forward.1} parent=1 // pred_check_branch
      %17 = sbr.rel (0) target = $region9
    $region8: #{network_forward.1} parent=1 // pred_region
      %19 = vsyncadd [#allocation4], 0
      %s21 = sshll.u32 %s1, 4
      %s22 = int_to_ptr.vmem [resolvable:$true] %s21
      %24 = dma.vmem_to_smem %s22, 32, [#allocation2], [#allocation4]
    $region9: #{network_forward.1} parent=1 // pred_fallthru
      _
    // Predicated region
    $region10: #{network_forward.1} parent=1 // pred_check
      _
    $region11: #{network_forward.1} parent=1 // pred_check_branch
      %26 = sbr.rel (0) target = $region13
    $region12: #{network_forward.1} parent=1 // pred_region
      %28 = vsyncadd [#allocation6], 0
      %s30 = sshll.u32 %s2, 4
      %s31 = int_to_ptr.vmem [resolvable:$true] %s30
      %33 = dma.vmem_to_smem %s31, 16, [#allocation5], [#allocation6]
    $region13: #{network_forward.1} parent=1 // pred_fallthru
      _
    // Predicated region
    $region14: #{network_forward.1} parent=1 // pred_check
      _
    $region15: #{network_forward.1} parent=1 // pred_check_branch
      %35 = sbr.rel (0) target = $region17
    $region16: #{network_forward.1} parent=1 // pred_region
      %37 = dma.done [#allocation4], 32
    $region17: #{network_forward.1} parent=1 // pred_fallthru
      _
    // Predicated region
    $region18: #{network_forward.1} parent=1 // pred_check
      _
    $region19: #{network_forward.1} parent=1 // pred_check_branch
      %39 = sbr.rel (0) target = $region21
    $region20: #{network_forward.1} parent=1 // pred_region
      %41 = dma.done [#allocation6], 16
    $region21: #{network_forward.1} parent=1 // pred_fallthru
      _
    %42 = sfence
    %v43 = vld [vmem:[%s0] sm:$0x3]
    %v44 = vlaneseq
    %v45 = vand.u32 %v44, 127
    %vm46 = vcmp.lt.s32.totalorder %v45, 3
    %47 = vrot.lane.b32.xlu0 %v43, 3
    %v48 = vpop.permute.xlu0 %47
    %v49 = vsel %vm46, 0.0, %v48
    %vm50 = vcmp.lt.s32.totalorder %v45, 2
    %51 = vrot.lane.b32.xlu0 %v43, 2
    %v52 = vpop.permute.xlu0 %51
    %v53 = vsel %vm50, 0.0, %v52
    %vm54 = vcmp.lt.s32.totalorder %v45, 1
    %55 = vrot.lane.b32.xlu0 %v43, 1
    %v56 = vpop.permute.xlu0 %55
    %v57 = vsel %vm54, 0.0, %v56
    %s58 = sld [smem:[#allocation5]]
    %s59 = sld [smem:[#allocation2]]
    %v60 = vstv %s59
    %v61 = vmul.f32 %v60, %v49
    %v62 = vstv %s58
    %v63 = vadd.f32 %v62, %v61
    %s64 = sld [smem:[#allocation2 + $0x1]]
    %v65 = vstv %s64
    %v66 = vmul.f32 %v65, %v53
    %v67 = vadd.f32 %v63, %v66
    %s68 = sld [smem:[#allocation2 + $0x2]]
    %v69 = vstv %s68
    %v70 = vmul.f32 %v69, %v57
    %v71 = vadd.f32 %v67, %v70
    %s72 = sld [smem:[#allocation5 + $0x1]]
    %s73 = sld [smem:[#allocation2 + $0x80]]
    %v74 = vstv %s73
    %v75 = vmul.f32 %v74, %v49
    %v76 = vstv %s72
    %v77 = vadd.f32 %v76, %v75
    %s78 = sld [smem:[#allocation2 + $0x81]]
    %v79 = vstv %s78
    %v80 = vmul.f32 %v79, %v53
    %v81 = vadd.f32 %v77, %v80
    %s82 = sld [smem:[#allocation2 + $0x82]]
    %v83 = vstv %s82
    %v84 = vmul.f32 %v83, %v57
    %v85 = vadd.f32 %v81, %v84
    %v86 = vmul.f32 %v85, 1.442695
    %v87 = vpow.pop %v86
    %88 = vst [vmem:[#allocation7] sm:$0x3] %v71
    %89 = vst [vmem:[#allocation8] sm:$0x3] %v87
    // Predicated region
    $region22: #{network_forward.1} parent=1 // pred_check
      _
    $region23: #{network_forward.1} parent=1 // pred_check_branch
      %91 = sbr.rel (0) target = $region25
    $region24: #{network_forward.1} parent=1 // pred_region
      %93 = vsyncadd [#allocation3], 0
      %s95 = sshll.u32 [#allocation7], 4
      %s96 = int_to_ptr.vmem [resolvable:$true] %s95
      %s97 = sshll.u32 %s3, 4
      %s98 = int_to_ptr.hbm [resolvable:$true] %s97
      %100 = dma.vmem_to_hbm [thread:$0]  %s96, 32, %s98, [#allocation3]
    $region25: #{network_forward.1} parent=1 // pred_fallthru
      _
    // Predicated region
    $region26: #{network_forward.1} parent=1 // pred_check
      _
    $region27: #{network_forward.1} parent=1 // pred_check_branch
      %102 = sbr.rel (0) target = $region29
    $region28: #{network_forward.1} parent=1 // pred_region
      %104 = vsyncadd [#allocation9], 0
      %s106 = sshll.u32 [#allocation8], 4
      %s107 = int_to_ptr.vmem [resolvable:$true] %s106
      %s108 = sshll.u32 %s4, 4
      %s109 = int_to_ptr.hbm [resolvable:$true] %s108
      %111 = dma.vmem_to_hbm [thread:$0]  %s107, 32, %s109, [#allocation9]
    $region29: #{network_forward.1} parent=1 // pred_fallthru
      _
    // Predicated region
    $region30: #{network_forward.1} parent=1 // pred_check
      _
    $region31: #{network_forward.1} parent=1 // pred_check_branch
      %113 = sbr.rel (0) target = $region33
    $region32: #{network_forward.1} parent=1 // pred_region
      %115 = dma.done [#allocation3], 32
    $region33: #{network_forward.1} parent=1 // pred_fallthru
      _
    // Predicated region
    $region34: #{network_forward.1} parent=1 // pred_check
      _
    $region35: #{network_forward.1} parent=1 // pred_check_branch
      %117 = sbr.rel (0) target = $region37
    $region36: #{network_forward.1} parent=1 // pred_region
      %119 = dma.done [#allocation9], 32
    $region37: #{network_forward.1} parent=1 // pred_fallthru
      _
    %120 = vsyncpa [#allocation3], 1
    %121 = vsyncpa [#allocation9], 1
    %122 = vsyncpa [#allocation4], 1
    %123 = vsyncpa [#allocation6], 1

</llo_original>
